<compile_context>
chip_gen: v5e
topology: v5e:2x2
jax: 0.10.0
libtpu: 0.0.40
codegen_flags: <defaults>
</compile_context>

<pallas_src>
import functools
import math

import jax
import jax.numpy as jnp
from jax import lax
from jax.experimental import pallas as pl
from jax.experimental.pallas import tpu as pltpu


def _round_up(x, m):
    return (x + m - 1) // m * m


def _vmem_budget_bytes():
    """~3/4 of physical VMEM: ~48 MiB on v7x (64 MiB/TC), ~96 MiB on v5e/v6e."""
    try:
        cap = int(pltpu.get_tpu_info().vmem_capacity_bytes)
    except Exception:
        cap = 64 * 1024 * 1024
    return max(16 * 1024 * 1024, cap * 3 // 4)


def _pick_tile_s(S, C, d_pad, vmem_budget):
    """Sequence-tile rows: >= ~1 MiB of output per grid step, clamped to S / VMEM."""
    target_rows = max(8, -(-(1 << 20) // (d_pad * 4)))        # ceil(1 MiB / row-bytes)
    tile_s = min(_round_up(S, 8), _round_up(target_rows, 8))

    def step_bytes(ts):
        # double-buffered x / pos / out tiles (the dominant pipeline footprint)
        return 2 * 4 * (ts * C + 2 * ts * d_pad)

    while tile_s > 8 and step_bytes(tile_s) > vmem_budget:
        tile_s = _round_up(max(8, tile_s // 2), 8)
    return tile_s


def _embeddings_kernel(x_ref, w_ref, pos_ref, g_ref, beta_ref, o_ref, *, d_true):
    # x_ref   : (TILE_S, C)       row tile of one batch element (batch dim squeezed)
    # w_ref   : (C, D_pad)        folded weight w0 @ w1 (zero lane-padded), resident
    # pos_ref : (TILE_S, D_pad)   positional rows + folded bias (resident across batch)
    # g_ref, beta_ref : (1, D_pad) LayerNorm gamma/beta (zero lane-padded)
    # o_ref   : (TILE_S, D_pad)
    x = x_ref[...]

    # Token projection (two Linears folded) + positional add.  Bias is already
    # folded into pos_ref; the tiny C-contraction goes to the idle MXU.
    h = pos_ref[...] + jnp.dot(x, w_ref[...], preferred_element_type=jnp.float32)

    # Single-pass LayerNorm statistics.  Padded lanes of h are exactly zero, so
    # sums over D_pad equal sums over the true D.  eps=1e-12 matches torch.
    inv_d = 1.0 / d_true
    mean = jnp.sum(h, axis=-1, keepdims=True) * inv_d
    mean_sq = jnp.sum(h * h, axis=-1, keepdims=True) * inv_d
    var = mean_sq - mean * mean
    y = (h - mean) * lax.rsqrt(var + 1e-12)

    # Dropout is identity at inference.
    # TODO(synk): training-mode dropout (p=0.5) not implemented (stochastic).
    o_ref[...] = (y * g_ref[...] + beta_ref[...]).astype(o_ref.dtype)


def prepare_params(params, seq_len, *, tile_s=None):
    """One-time (per parameter set / sequence length) preprocessing, hoisted out
    of the per-call path: fold the Linears, pre-add the folded bias into the
    positional rows, lane-pad, and derive tiling / VMEM budget."""
    C, D = params["w0"].shape
    S = seq_len
    d_pad = _round_up(D, 128)

    vmem_budget = _vmem_budget_bytes()
    if tile_s is None:
        tile_s = _pick_tile_s(S, C, d_pad, vmem_budget)
    else:
        tile_s = max(8, _round_up(tile_s, 8))
    s_pad = _round_up(S, tile_s)

    # Exact fold (no nonlinearity between the two Linears):
    #   (x @ w0 + b0) @ w1 + b1  ==  x @ (w0 @ w1) + (b0 @ w1 + b1)
    w_eff = jnp.dot(params["w0"], params["w1"], preferred_element_type=jnp.float32)
    b_eff = jnp.dot(params["b0"], params["w1"],
                    preferred_element_type=jnp.float32) + params["b1"]

    pad_d = d_pad - D
    w_eff = jnp.pad(w_eff, ((0, 0), (0, pad_d)))
    b_eff = jnp.pad(b_eff, ((0, 0), (0, pad_d)))
    ln_g = jnp.pad(params["ln_g"], ((0, 0), (0, pad_d)))
    ln_b = jnp.pad(params["ln_b"], ((0, 0), (0, pad_d)))

    # Positional rows (row/lane padded) with the folded bias pre-added: removes
    # one input stream and one full-tile vadd per element inside the kernel.
    # Padded lanes stay exactly zero (pos pad zero + b_eff pad zero).
    pos = jnp.pad(params["pos_table"][:S], ((0, s_pad - S), (0, pad_d)))
    pos_b = pos + b_eff

    return {
        "w_eff": w_eff, "pos_b": pos_b, "ln_g": ln_g, "ln_b": ln_b,
        "C": C, "D": D, "S": S, "d_pad": d_pad, "s_pad": s_pad,
        "tile_s": tile_s, "vmem_budget": vmem_budget,
    }


def embeddings_forward(x, prep):
    """x: (B, S, C) float32 -> (B, S, D) float32."""
    B, S, C = x.shape
    assert S == prep["S"] and C == prep["C"]
    D, d_pad = prep["D"], prep["d_pad"]
    s_pad, tile_s = prep["s_pad"], prep["tile_s"]
    n_s_tiles = s_pad // tile_s

    if s_pad != S:
        x = jnp.pad(x, ((0, 0), (0, s_pad - S), (0, 0)))

    kernel = functools.partial(_embeddings_kernel, d_true=D)

    # Double-buffered x/pos/out tiles + resident params, with headroom, capped
    # at the per-generation budget (~48 MiB v7x, ~96 MiB v5e/v6e).
    step_bytes = 2 * 4 * (tile_s * C + 2 * tile_s * d_pad)
    param_bytes = 4 * (C * d_pad + 2 * d_pad)
    vmem_limit = min(prep["vmem_budget"],
                     max(8 * 1024 * 1024,
                         step_bytes + param_bytes + 2 * 1024 * 1024))

    # pos rows are read once per sequence tile (not once per (s, b)).
    flops = 2 * B * s_pad * d_pad * C + 7 * B * s_pad * d_pad
    bytes_accessed = 4 * (B * s_pad * C + s_pad * d_pad + C * d_pad
                          + 2 * d_pad + B * s_pad * d_pad)

    out = pl.pallas_call(
        kernel,
        out_shape=jax.ShapeDtypeStruct((B, s_pad, d_pad), jnp.float32),
        # Batch innermost: the pos tile's block index is constant across the
        # inner batch loop, so Pallas fetches it once per sequence tile.
        grid=(n_s_tiles, B),
        in_specs=[
            pl.BlockSpec((None, tile_s, C), lambda s, b: (b, s, 0)),     # x
            pl.BlockSpec((C, d_pad), lambda s, b: (0, 0)),               # w_eff (resident)
            pl.BlockSpec((tile_s, d_pad), lambda s, b: (s, 0)),          # pos + bias rows
            pl.BlockSpec((1, d_pad), lambda s, b: (0, 0)),               # LN gamma
            pl.BlockSpec((1, d_pad), lambda s, b: (0, 0)),               # LN beta
        ],
        out_specs=pl.BlockSpec((None, tile_s, d_pad), lambda s, b: (b, s, 0)),
        compiler_params=pltpu.CompilerParams(
            dimension_semantics=("parallel", "arbitrary"),
            vmem_limit_bytes=vmem_limit,
        ),
        cost_estimate=pl.CostEstimate(
            flops=flops, transcendentals=B * s_pad,
            bytes_accessed=bytes_accessed),
    )(x, prep["w_eff"], prep["pos_b"], prep["ln_g"], prep["ln_b"])

    # TODO(synk): downstream bf16 output / bf16 pos table would halve HBM
    # traffic if consumers accept it; kept f32 to match the reference exactly.
    if s_pad != S or d_pad != D:
        # Crop only when padding was actually applied.
        out = out[:, :S, :D]
    return out


def init_params(key, num_channels, embed_dim, max_position_embeddings):
    """Deterministic synthetic init mirroring the PyTorch module's shapes."""
    k0, k1, k2, k3, k4 = jax.random.split(key, 5)

    # nn.Linear(C, D): weight (D, C), bias (D); stored transposed as (C, D).
    bound0 = 1.0 / math.sqrt(num_channels)
    w0 = jax.random.uniform(k0, (num_channels, embed_dim),
                            minval=-bound0, maxval=bound0, dtype=jnp.float32)
    b0 = jax.random.uniform(k1, (1, embed_dim),
                            minval=-bound0, maxval=bound0, dtype=jnp.float32)

    # nn.Linear(D, D)
    bound1 = 1.0 / math.sqrt(embed_dim)
    w1 = jax.random.uniform(k2, (embed_dim, embed_dim),
                            minval=-bound1, maxval=bound1, dtype=jnp.float32)
    b1 = jax.random.uniform(k3, (1, embed_dim),
                            minval=-bound1, maxval=bound1, dtype=jnp.float32)

    # nn.Embedding(max_pos, D): normal(0, 1)
    pos_table = jax.random.normal(k4, (max_position_embeddings, embed_dim),
                                  dtype=jnp.float32)

    # nn.LayerNorm(D): gamma=1, beta=0
    ln_g = jnp.ones((1, embed_dim), jnp.float32)
    ln_b = jnp.zeros((1, embed_dim), jnp.float32)

    return {"w0": w0, "b0": b0, "w1": w1, "b1": b1,
            "pos_table": pos_table, "ln_g": ln_g, "ln_b": ln_b}


def reference_forward(x, params):
    """Pure-JAX reference of the same math (eval-mode dropout), unfused."""
    B, S, C = x.shape
    h = x @ params["w0"] + params["b0"]
    h = h @ params["w1"] + params["b1"]
    h = h + params["pos_table"][:S][None, :, :]
    mean = jnp.mean(h, axis=-1, keepdims=True)
    var = jnp.mean((h - mean) ** 2, axis=-1, keepdims=True)
    y = (h - mean) / jnp.sqrt(var + 1e-12)
    return y * params["ln_g"] + params["ln_b"]


if __name__ == "__main__":
    B, S, C, D, MAX_POS = 2, 16, 4, 32, 64

    key = jax.random.PRNGKey(0)
    kx, kp = jax.random.split(key)
    x = jax.random.normal(kx, (B, S, C), dtype=jnp.float32)
    params = init_params(kp, num_channels=C, embed_dim=D,
                         max_position_embeddings=MAX_POS)
    ref = reference_forward(x, params)

    # 1) Explicit small tile so the test exercises multiple sequence tiles
    #    and pos-tile residency across the inner batch loop (grid = (2, 2)).
    prep_small = prepare_params(params, seq_len=S, tile_s=8)
    out_small = jax.block_until_ready(embeddings_forward(x, prep_small))
    assert out_small.shape == (B, S, D)
    assert jnp.allclose(out_small, ref, atol=1e-4, rtol=1e-4), "mismatch (tile_s=8)"

    # 2) Auto-derived tile size (the production path).
    prep_auto = prepare_params(params, seq_len=S)
    out_auto = jax.block_until_ready(embeddings_forward(x, prep_auto))
    assert out_auto.shape == (B, S, D)
    assert jnp.allclose(out_auto, ref, atol=1e-4, rtol=1e-4), "mismatch (auto tile)"

    print("KERNEL_OK")
</pallas_src>

<mosaic_0001>
module attributes {stable_mosaic.version = 11 : i64} {
  func.func @_embeddings_kernel(%arg0: i32, %arg1: i32, %arg2: memref<1x8x4xf32, #tpu.memory_space<vmem>>, %arg3: memref<4x128xf32, #tpu.memory_space<vmem>>, %arg4: memref<8x128xf32, #tpu.memory_space<vmem>>, %arg5: memref<1x128xf32, #tpu.memory_space<vmem>>, %arg6: memref<1x128xf32, #tpu.memory_space<vmem>>, %arg7: memref<1x8x128xf32, #tpu.memory_space<vmem>>) attributes {dimension_semantics = [#tpu.dimension_semantics<parallel>, #tpu.dimension_semantics<arbitrary>], iteration_bounds = array<i64: 2, 2>, scalar_prefetch = 0 : i64, scratch_operands = 0 : i64, tpu.core_type = #tpu.core_type<tc>, window_params = [{transform_indices = @transform_0, window_bounds = array<i64: 1, 8, 4>}, {pipeline_mode = #tpu.pipeline_mode<synchronous>, transform_indices = @transform_1, window_bounds = array<i64: 4, 128>}, {transform_indices = @transform_2, window_bounds = array<i64: 8, 128>}, {pipeline_mode = #tpu.pipeline_mode<synchronous>, transform_indices = @transform_3, window_bounds = array<i64: 1, 128>}, {pipeline_mode = #tpu.pipeline_mode<synchronous>, transform_indices = @transform_4, window_bounds = array<i64: 1, 128>}, {transform_indices = @transform_5, window_bounds = array<i64: 1, 8, 128>}]} {
    %c0 = arith.constant 0 : index
    %c0_0 = arith.constant 0 : index
    %c0_1 = arith.constant 0 : index
    %0 = vector.load %arg2[%c0, %c0_0, %c0_1] : memref<1x8x4xf32, #tpu.memory_space<vmem>>, vector<1x8x4xf32>
    %1 = vector.shape_cast %0 : vector<1x8x4xf32> to vector<8x4xf32>
    %c0_2 = arith.constant 0 : index
    %c0_3 = arith.constant 0 : index
    %2 = vector.load %arg4[%c0_2, %c0_3] : memref<8x128xf32, #tpu.memory_space<vmem>>, vector<8x128xf32>
    %c0_4 = arith.constant 0 : index
    %c0_5 = arith.constant 0 : index
    %3 = vector.load %arg3[%c0_4, %c0_5] : memref<4x128xf32, #tpu.memory_space<vmem>>, vector<4x128xf32>
    %cst = arith.constant dense<0.000000e+00> : vector<8x128xf32>
    %4 = tpu.matmul %1, %3, %cst {dimension_numbers = #tpu.dot_dimension_numbers<[1], [0], [0], [1], [0, 0, 1, 1], [], []>} : vector<8x4xf32>, vector<4x128xf32>, vector<8x128xf32> -> vector<8x128xf32>
    %5 = arith.addf %2, %4 : vector<8x128xf32>
    %cst_6 = arith.constant dense<0.000000e+00> : vector<8xf32>
    %6 = vector.multi_reduction <add>, %5, %cst_6 [1] : vector<8x128xf32> to vector<8xf32>
    %7 = vector.shape_cast %6 : vector<8xf32> to vector<8x1xf32>
    %cst_7 = arith.constant 3.125000e-02 : f32
    %8 = vector.broadcast %cst_7 : f32 to vector<8x1xf32>
    %9 = arith.mulf %7, %8 : vector<8x1xf32>
    %10 = arith.mulf %5, %5 : vector<8x128xf32>
    %cst_8 = arith.constant dense<0.000000e+00> : vector<8xf32>
    %11 = vector.multi_reduction <add>, %10, %cst_8 [1] : vector<8x128xf32> to vector<8xf32>
    %12 = vector.shape_cast %11 : vector<8xf32> to vector<8x1xf32>
    %cst_9 = arith.constant 3.125000e-02 : f32
    %13 = vector.broadcast %cst_9 : f32 to vector<8x1xf32>
    %14 = arith.mulf %12, %13 : vector<8x1xf32>
    %15 = arith.mulf %9, %9 : vector<8x1xf32>
    %16 = arith.subf %14, %15 : vector<8x1xf32>
    %17 = vector.broadcast %9 : vector<8x1xf32> to vector<8x128xf32>
    %18 = arith.subf %5, %17 : vector<8x128xf32>
    %cst_10 = arith.constant 9.99999996E-13 : f32
    %19 = vector.broadcast %cst_10 : f32 to vector<8x1xf32>
    %20 = arith.addf %16, %19 : vector<8x1xf32>
    %21 = math.rsqrt %20 : vector<8x1xf32>
    %22 = vector.broadcast %21 : vector<8x1xf32> to vector<8x128xf32>
    %23 = arith.mulf %18, %22 : vector<8x128xf32>
    %c0_11 = arith.constant 0 : index
    %c0_12 = arith.constant 0 : index
    %24 = vector.load %arg5[%c0_11, %c0_12] : memref<1x128xf32, #tpu.memory_space<vmem>>, vector<1x128xf32>
    %25 = vector.broadcast %24 : vector<1x128xf32> to vector<8x128xf32>
    %26 = arith.mulf %23, %25 : vector<8x128xf32>
    %c0_13 = arith.constant 0 : index
    %c0_14 = arith.constant 0 : index
    %27 = vector.load %arg6[%c0_13, %c0_14] : memref<1x128xf32, #tpu.memory_space<vmem>>, vector<1x128xf32>
    %28 = vector.broadcast %27 : vector<1x128xf32> to vector<8x128xf32>
    %29 = arith.addf %26, %28 : vector<8x128xf32>
    %c0_15 = arith.constant 0 : index
    %c0_16 = arith.constant 0 : index
    %c0_17 = arith.constant 0 : index
    %30 = vector.load %arg7[%c0_15, %c0_16, %c0_17] : memref<1x8x128xf32, #tpu.memory_space<vmem>>, vector<1x8x128xf32>
    %31 = vector.shape_cast %30 : vector<1x8x128xf32> to vector<8x128xf32>
    %32 = vector.shape_cast %29 : vector<8x128xf32> to vector<1x8x128xf32>
    tpu.vector_store %arg7[%c0_15, %c0_16, %c0_17], %32 {strides = array<i32>} : memref<1x8x128xf32, #tpu.memory_space<vmem>>, vector<1x8x128xf32>,
    return
  }
  func.func @transform_0(%arg0: i32, %arg1: i32) -> (i32, i32, i32) {
    %c0_i32 = arith.constant 0 : i32
    %c0_i32_0 = arith.constant 0 : i32
    return %arg1, %arg0, %c0_i32 : i32, i32, i32
  }
  func.func @transform_1(%arg0: i32, %arg1: i32) -> (i32, i32) {
    %c0_i32 = arith.constant 0 : i32
    %c0_i32_0 = arith.constant 0 : i32
    %c0_i32_1 = arith.constant 0 : i32
    return %c0_i32, %c0_i32_0 : i32, i32
  }
  func.func @transform_2(%arg0: i32, %arg1: i32) -> (i32, i32) {
    %c0_i32 = arith.constant 0 : i32
    %c0_i32_0 = arith.constant 0 : i32
    return %arg0, %c0_i32 : i32, i32
  }
  func.func @transform_3(%arg0: i32, %arg1: i32) -> (i32, i32) {
    %c0_i32 = arith.constant 0 : i32
    %c0_i32_0 = arith.constant 0 : i32
    %c0_i32_1 = arith.constant 0 : i32
    return %c0_i32, %c0_i32_0 : i32, i32
  }
  func.func @transform_4(%arg0: i32, %arg1: i32) -> (i32, i32) {
    %c0_i32 = arith.constant 0 : i32
    %c0_i32_0 = arith.constant 0 : i32
    %c0_i32_1 = arith.constant 0 : i32
    return %c0_i32, %c0_i32_0 : i32, i32
  }
  func.func @transform_5(%arg0: i32, %arg1: i32) -> (i32, i32, i32) {
    %c0_i32 = arith.constant 0 : i32
    %c0_i32_0 = arith.constant 0 : i32
    return %arg1, %arg0, %c0_i32 : i32, i32, i32
  }
}

</mosaic_0001>

<llo_original>
// kernel: tpu_custom_call.1
$region0: #{tpu_custom_call.1}
  #allocation0 [shape = 'u32[]', space=smem, size = 0x4, offset = 0x4, fixed_abs, tag = 'smem constant byte address 0x4 - core index']
  #allocation1 [shape = 'u32[72,128]{1,0:T(1,128)}', space=vmem, size = 0x9000, scoped, tag = 'internal scratch']
  %s0 = inlined_call_operand.vmem [shape: f32[2,16,4], index: 0, kind: input, shape index: {}]
  %s1 = inlined_call_operand.vmem [shape: f32[4,128], index: 1, kind: input, shape index: {}]
  %s2 = inlined_call_operand.vmem [shape: f32[16,128], index: 2, kind: input, shape index: {}]
  %s3 = inlined_call_operand.vmem [shape: f32[1,128], index: 3, kind: input, shape index: {}]
  %s4 = inlined_call_operand.vmem [shape: f32[1,128], index: 4, kind: input, shape index: {}]
  %s5 = inlined_call_operand.hbm [shape: f32[2,16,128], index: 5, kind: output, shape index: {}]
  %s6 = sld [smem:[#allocation0]]
  $region53: #{tpu_custom_call.1} parent=0
    _
  %s8 = ssub.s32 1, %s6
  %s9 = scalar_select 0, %s8, %s6
  $region1: #{tpu_custom_call.1} parent=0
    #allocation2 [shape = 'u8[8192]{0}', space=vmem, size = 0x2000, scoped, tag = 'output window, operand 0']
    #allocation3 [shape = 's32[2]{0}', space=sflag, size = 0x8, scoped, tag = 'scoped memory for tpu_custom_call.1']
    %10 = vsyncpa [#allocation3], 0
    %s11 = scalar_lea.sflag [#allocation3], 1
    %12 = vsyncpa %s11, 0
    loop: start=0, step=1, limit=6
    $region2: #{tpu_custom_call.1} parent=1 // loop_pre_header
      _
    $region3: #{tpu_custom_call.1} parent=1 // loop_header
      %s14 = sphi 0, %s18
      %p15 = scmp.ge.s32.totalorder %s14, 6
      %s21 = sphi 0, %s33
      %s22 = sphi 0, %s29
      %s23 = sphi 0, %s21
      %s24 = sphi 0, %s22
      %s25 = sphi 0, %s23
      %s26 = sphi 0, %s24
      %s38 = sphi 0, %s40
      %s41 = sphi 0, %s38
      %s42 = sphi 0, %s41
      %s58 = sphi 0, %s42
      %s62 = sphi 0, %s62
      %s64 = sphi 0, %s62
      %s65 = sphi 0, %s64
      %s79 = sphi 0, %s65
      %s85 = sphi 0, %s87
      %s88 = sphi 0, %s85
      %s89 = sphi 0, %s88
      %s105 = sphi 0, %s89
      %s109 = sphi 0, %s109
      %s111 = sphi 0, %s109
      %s112 = sphi 0, %s111
      %s126 = sphi 0, %s112
      %s130 = sphi 0, %s130
      %s132 = sphi 0, %s130
      %s133 = sphi 0, %s132
      %s147 = sphi 0, %s133
      %s155 = sphi 0, %s157
      %s158 = sphi 0, %s155
      %s159 = sphi 0, %s158
      %s175 = sphi 0, %s159
    $region4: #{tpu_custom_call.1} parent=1 // loop_header_branch
      %17 = sbr.rel (%p15) target = $region8
    $region5: #{tpu_custom_call.1} parent=1 // loop_body
      %s19 = ssub.s32 %s14, 1
      %s20 = ssub.s32 %s14, 2
      %s27 = sadd.s32 1, %s22
      %p28 = scmp.ge.s32.totalorder %s27, 2
      %s29 = scalar_select %p28, 0, %s27
      %s30 = sadd.s32 1, %s21
      %s31 = scalar_select %p28, %s30, %s21
      %p32 = scmp.ge.s32.totalorder %s31, 2
      %s33 = scalar_select %p32, 0, %s31
      %s34 = ssub.s32 %s22, %s29
      %s35 = ssub.s32 %s21, %s33
      %s36 = sor.u32 %s34, %s35
      %p37 = scmp.eq.s32.totalorder %s36, 0
      %s39 = sadd.s32 %s38, 1
      %s40 = scalar_select %p37, %s38, %s39
      %p43 = pneg %p37
      %p44 = scmp.eq.s32.totalorder %s14, 3
      %p45 = por %p43, %p44
      %p46 = scmp.ne.s32.totalorder %s38, %s41
      %p47 = scmp.eq.s32.totalorder %s14, 0
      %p48 = por %p46, %p47
      %p49 = scmp.ne.s32.totalorder %s38, %s41
      %p50 = scmp.eq.s32.totalorder %s19, 3
      %p51 = por %p49, %p50
      %p52 = scmp.ne.s32.totalorder %s41, %s42
      %p53 = scmp.eq.s32.totalorder %s19, 0
      %p54 = por %p52, %p53
      %p55 = scmp.ne.s32.totalorder %s41, %s42
      %p56 = scmp.eq.s32.totalorder %s20, 3
      %p57 = por %p55, %p56
      %p59 = scmp.ne.s32.totalorder %s42, %s58
      %p60 = scmp.eq.s32.totalorder %s20, 0
      %p61 = por %p59, %p60
      %s63 = sadd.s32 %s62, 1
      %p66 = scmp.eq.s32.totalorder %s14, 3
      %p67 = scmp.ne.s32.totalorder %s62, %s64
      %p68 = scmp.eq.s32.totalorder %s14, 0
      %p69 = por %p67, %p68
      %p70 = scmp.ne.s32.totalorder %s62, %s64
      %p71 = scmp.eq.s32.totalorder %s19, 3
      %p72 = por %p70, %p71
      %p73 = scmp.ne.s32.totalorder %s64, %s65
      %p74 = scmp.eq.s32.totalorder %s19, 0
      %p75 = por %p73, %p74
      %p76 = scmp.ne.s32.totalorder %s64, %s65
      %p77 = scmp.eq.s32.totalorder %s20, 3
      %p78 = por %p76, %p77
      %p80 = scmp.ne.s32.totalorder %s65, %s79
      %p81 = scmp.eq.s32.totalorder %s20, 0
      %p82 = por %p80, %p81
      %s83 = ssub.s32 %s21, %s33
      %p84 = scmp.eq.s32.totalorder %s83, 0
      %s86 = sadd.s32 %s85, 1
      %s87 = scalar_select %p84, %s85, %s86
      %p90 = pneg %p84
      %p91 = scmp.eq.s32.totalorder %s14, 3
      %p92 = por %p90, %p91
      %p93 = scmp.ne.s32.totalorder %s85, %s88
      %p94 = scmp.eq.s32.totalorder %s14, 0
      %p95 = por %p93, %p94
      %p96 = scmp.ne.s32.totalorder %s85, %s88
      %p97 = scmp.eq.s32.totalorder %s19, 3
      %p98 = por %p96, %p97
      %p99 = scmp.ne.s32.totalorder %s88, %s89
      %p100 = scmp.eq.s32.totalorder %s19, 0
      %p101 = por %p99, %p100
      %p102 = scmp.ne.s32.totalorder %s88, %s89
      %p103 = scmp.eq.s32.totalorder %s20, 3
      %p104 = por %p102, %p103
      %p106 = scmp.ne.s32.totalorder %s89, %s105
      %p107 = scmp.eq.s32.totalorder %s20, 0
      %p108 = por %p106, %p107
      %s110 = sadd.s32 %s109, 1
      %p113 = scmp.eq.s32.totalorder %s14, 3
      %p114 = scmp.ne.s32.totalorder %s109, %s111
      %p115 = scmp.eq.s32.totalorder %s14, 0
      %p116 = por %p114, %p115
      %p117 = scmp.ne.s32.totalorder %s109, %s111
      %p118 = scmp.eq.s32.totalorder %s19, 3
      %p119 = por %p117, %p118
      %p120 = scmp.ne.s32.totalorder %s111, %s112
      %p121 = scmp.eq.s32.totalorder %s19, 0
      %p122 = por %p120, %p121
      %p123 = scmp.ne.s32.totalorder %s111, %s112
      %p124 = scmp.eq.s32.totalorder %s20, 3
      %p125 = por %p123, %p124
      %p127 = scmp.ne.s32.totalorder %s112, %s126
      %p128 = scmp.eq.s32.totalorder %s20, 0
      %p129 = por %p127, %p128
      %s131 = sadd.s32 %s130, 1
      %p134 = scmp.eq.s32.totalorder %s14, 3
      %p135 = scmp.ne.s32.totalorder %s130, %s132
      %p136 = scmp.eq.s32.totalorder %s14, 0
      %p137 = por %p135, %p136
      %p138 = scmp.ne.s32.totalorder %s130, %s132
      %p139 = scmp.eq.s32.totalorder %s19, 3
      %p140 = por %p138, %p139
      %p141 = scmp.ne.s32.totalorder %s132, %s133
      %p142 = scmp.eq.s32.totalorder %s19, 0
      %p143 = por %p141, %p142
      %p144 = scmp.ne.s32.totalorder %s132, %s133
      %p145 = scmp.eq.s32.totalorder %s20, 3
      %p146 = por %p144, %p145
      %p148 = scmp.ne.s32.totalorder %s133, %s147
      %p149 = scmp.eq.s32.totalorder %s20, 0
      %p150 = por %p148, %p149
      %s151 = ssub.s32 %s22, %s29
      %s152 = ssub.s32 %s21, %s33
      %s153 = sor.u32 %s151, %s152
      %p154 = scmp.eq.s32.totalorder %s153, 0
      %s156 = sadd.s32 %s155, 1
      %s157 = scalar_select %p154, %s155, %s156
      %p160 = pneg %p154
      %p161 = scmp.eq.s32.totalorder %s14, 3
      %p162 = por %p160, %p161
      %p163 = scmp.ne.s32.totalorder %s155, %s158
      %p164 = scmp.eq.s32.totalorder %s14, 0
      %p165 = por %p163, %p164
      %p166 = scmp.ne.s32.totalorder %s155, %s158
      %p167 = scmp.eq.s32.totalorder %s19, 3
      %p168 = por %p166, %p167
      %p169 = scmp.ne.s32.totalorder %s158, %s159
      %p170 = scmp.eq.s32.totalorder %s19, 0
      %p171 = por %p169, %p170
      %p172 = scmp.ne.s32.totalorder %s158, %s159
      %p173 = scmp.eq.s32.totalorder %s20, 3
      %p174 = por %p172, %p173
      %p176 = scmp.ne.s32.totalorder %s159, %s175
      %p177 = scmp.eq.s32.totalorder %s20, 0
      %p178 = por %p176, %p177
      %p179 = scmp.le.s32.totalorder 1, %s14
      %p180 = scmp.lt.s32.totalorder %s14, 5
      %p181 = pnand %p179, %p180
      %p182 = pneg %p181
      // Predicated region
      $region9: #{tpu_custom_call.1} parent=5 // pred_check
        _
      $region10: #{tpu_custom_call.1} parent=5 // pred_check_branch
        %184 = sbr.rel (%p181) target = $region12
      $region11: #{tpu_custom_call.1} parent=5 // pred_region
        %s185 = ssub.s32 %s14, 1
        // Predicated region
        $region13: #{tpu_custom_call.1} parent=11 // pred_check
          %p186 = pneg %p75
        $region14: #{tpu_custom_call.1} parent=11 // pred_check_branch
          %188 = sbr.rel (%p186) target = $region16
        $region15: #{tpu_custom_call.1} parent=11 // pred_region
          _
        $region16: #{tpu_custom_call.1} parent=11 // pred_fallthru
          _
        // Predicated region
        $region17: #{tpu_custom_call.1} parent=11 // pred_check
          %p189 = pneg %p122
        $region18: #{tpu_custom_call.1} parent=11 // pred_check_branch
          %191 = sbr.rel (%p189) target = $region20
        $region19: #{tpu_custom_call.1} parent=11 // pred_region
          _
        $region20: #{tpu_custom_call.1} parent=11 // pred_fallthru
          _
        // Predicated region
        $region21: #{tpu_custom_call.1} parent=11 // pred_check
          %p192 = pneg %p143
        $region22: #{tpu_custom_call.1} parent=11 // pred_check_branch
          %194 = sbr.rel (%p192) target = $region24
        $region23: #{tpu_custom_call.1} parent=11 // pred_region
          _
        $region24: #{tpu_custom_call.1} parent=11 // pred_fallthru
          _
      $region12: #{tpu_custom_call.1} parent=5 // pred_fallthru
        _
      %p195 = scmp.lt.s32.totalorder %s14, 4
      // Predicated region
      $region25: #{tpu_custom_call.1} parent=5 // pred_check
        %p196 = pneg %p195
      $region26: #{tpu_custom_call.1} parent=5 // pred_check_branch
        %198 = sbr.rel (%p196) target = $region28
      $region27: #{tpu_custom_call.1} parent=5 // pred_region
        // Predicated region
        $region29: #{tpu_custom_call.1} parent=27 // pred_check
          %p199 = pneg %p48
        $region30: #{tpu_custom_call.1} parent=27 // pred_check_branch
          %201 = sbr.rel (%p199) target = $region32
        $region31: #{tpu_custom_call.1} parent=27 // pred_region
          %p202 = scmp.lt.s32.totalorder %s22, 1
          %s203 = scalar_select %p202, %s22, 1
          %p204 = scmp.lt.s32.totalorder %s21, 1
          %s205 = scalar_select %p204, %s21, 1
          %s206 = smul.addr %s203, 2
          %s207 = sadd.s32 %s205, %s206
          %s208 = smul.addr %s207, 8
          %s209 = scalar_lea.vmem %s0, %s208
        $region32: #{tpu_custom_call.1} parent=27 // pred_fallthru
          _
        // Predicated region
        $region33: #{tpu_custom_call.1} parent=27 // pred_check
          %p210 = pneg %p95
        $region34: #{tpu_custom_call.1} parent=27 // pred_check_branch
          %212 = sbr.rel (%p210) target = $region36
        $region35: #{tpu_custom_call.1} parent=27 // pred_region
          %p213 = scmp.lt.s32.totalorder %s21, 1
          %s214 = scalar_select %p213, %s21, 1
          %s215 = smul.addr %s214, 8
          %s216 = scalar_lea.vmem %s2, %s215
        $region36: #{tpu_custom_call.1} parent=27 // pred_fallthru
          _
      $region28: #{tpu_custom_call.1} parent=5 // pred_fallthru
        _
      %p217 = scmp.le.s32.totalorder 1, %s14
      %p218 = scmp.lt.s32.totalorder %s14, 5
      %p219 = pnand %p217, %p218
      %p220 = pneg %p219
      // Predicated region
      $region37: #{tpu_custom_call.1} parent=5 // pred_check
        _
      $region38: #{tpu_custom_call.1} parent=5 // pred_check_branch
        %222 = sbr.rel (%p219) target = $region40
      $region39: #{tpu_custom_call.1} parent=5 // pred_region
        %s223 = ssub.s32 %s14, 1
        %p224 = scmp.lt.s32.totalorder %s24, 1
        %s225 = scalar_select %p224, %s24, 1
        %p226 = scmp.lt.s32.totalorder %s23, 1
        %s227 = scalar_select %p226, %s23, 1
        %s228 = smul.addr %s225, 2
        %s229 = sadd.s32 %s227, %s228
        %s230 = smul.addr %s229, 8
        %s231 = scalar_lea.vmem %s0, %s230
        %p232 = pneg %p54
        %p233 = pneg %p51
        %p234 = pneg %p75
        %p235 = pneg %p72
        %p236 = scmp.lt.s32.totalorder %s23, 1
        %s237 = scalar_select %p236, %s23, 1
        %s238 = smul.addr %s237, 8
        %s239 = scalar_lea.vmem %s2, %s238
        %p240 = pneg %p101
        %p241 = pneg %p98
        %p242 = pneg %p122
        %p243 = pneg %p119
        %p244 = pneg %p143
        %p245 = pneg %p140
        %p246 = pneg %p171
        %p247 = pneg %p168
        %s248 = sand.u32 %s158, 1
        %s249 = scalar_lea.sflag [#allocation3], %s248
        %s250 = sand.u32 %s158, 1
        %s251 = smul.addr %s250, 8
        %s252 = scalar_lea.vmem [#allocation2], %s251
        %p253 = scmp.lt.s32.totalorder %s24, 1
        %s254 = scalar_select %p253, %s24, 1
        %p255 = scmp.lt.s32.totalorder %s23, 1
        %s256 = scalar_select %p255, %s23, 1
        %s257 = smul.addr %s254, 2
        %s258 = sadd.s32 %s256, %s257
        %s259 = smul.addr %s258, 8
        %s260 = scalar_lea.vmem %s0, %s259
        %p261 = scmp.lt.s32.totalorder %s23, 1
        %s262 = scalar_select %p261, %s23, 1
        %s263 = smul.addr %s262, 8
        %s264 = scalar_lea.vmem %s2, %s263
        %v265 = vld [vmem:[%s260] sm:$0xff]
        %v266 = vld [vmem:[%s264] sm:$0xff]
        %v267 = vld [vmem:[%s1] sm:$0xf]
        %vm268 = vcmask 31744
        %v270 = vsel %vm268, %v265, 0
        %vm272 = vcmask 1043456
        %v274 = vsel %vm272, %v267, 0
        %276 = vmatpush.msra.mxu0 0.0
        %277 = vmatpush.msra.mxu0 0.0
        %278 = vmatpush.msra.mxu0 0.0
        %279 = vmatpush.msra.mxu0 0.0
        %280 = vmatpush.msra.mxu0 0.0
        %281 = vmatpush.msra.mxu0 0.0
        %282 = vmatpush.msra.mxu0 0.0
        %283 = vmatpush.msra.mxu0 0.0
        %284 = vmatpush.msra.mxu0 0.0
        %285 = vmatpush.msra.mxu0 0.0
        %286 = vmatpush.msra.mxu0 0.0
        %287 = vmatpush.msra.mxu0 0.0
        %288 = vmatpush.msra.mxu0 0.0
        %289 = vmatpush.msra.mxu0 0.0
        %290 = vmatpush.msra.mxu0 0.0
        %291 = vmatpush.msra.mxu0 %v274
        %292 = vmatmul.f32.gmra.mxu0 %v270
        %v293 = vpop.f32.mrf.mxu0
        %v294 = vadd.f32 0.0, %v293
        %295 = vdwg.mxu0
        %v296 = vadd.f32 %v266, %v294
        %297 = vadd.xlane.f32.xlu0 %v296
        %v298 = vpop.xlane.xlu0 %297
        %v299 = vmul.f32 %v298, 0.03125
        %v300 = vmul.f32 %v296, %v296
        %301 = vadd.xlane.f32.xlu0 %v300
        %v302 = vpop.xlane.xlu0 %301
        %v303 = vmul.f32 %v302, 0.03125
        %v304 = vmul.f32 %v299, %v299
        %v305 = vsub.f32 %v303, %v304
        %v306 = vsub.f32 %v296, %v299
        %v307 = vadd.f32 %v305, 1e-12
        %v308 = vrsqrt.pop %v307
        %v309 = vmul.f32 %v308, %v307
        %v310 = vmul.f32 %v309, %v308
        %v311 = vmul.f32 0.5, %v310
        %v312 = vsub.f32 1.5, %v311
        %v313 = vmul.f32 %v308, %v312
        %vm314 = vweird.f32 %v307
        %vm315 = vweird.f32 %v308
        %vm316 = vmor %vm314, %vm315
        %v317 = vsel %vm316, %v308, %v313
        %v318 = vmul.f32 %v306, %v317
        %v319 = vld [vmem:[%s3] sm:$0x1]
        %v321 = vperm.slane %v319, 0
        %v323 = vmul.f32 %v318, %v321
        %v324 = vld [vmem:[%s4] sm:$0x1]
        %v326 = vperm.slane %v324, 0
        %v328 = vadd.f32 %v323, %v326
        %329 = vst [vmem:[%s252] sm:$0xff] %v328
        %s330 = sand.u32 %s158, 1
        %s331 = scalar_lea.sflag [#allocation3], %s330
        %s332 = sand.u32 %s158, 1
        %s333 = smul.addr %s332, 8
        %s334 = scalar_lea.vmem [#allocation2], %s333
        // Predicated region
        $region41: #{tpu_custom_call.1} parent=39 // pred_check
          %p335 = pneg %p168
        $region42: #{tpu_custom_call.1} parent=39 // pred_check_branch
          %337 = sbr.rel (%p335) target = $region44
        $region43: #{tpu_custom_call.1} parent=39 // pred_region
          %339 = vsyncadd %s331, 0
          %s340 = smul.addr %s24, 2
          %s341 = sadd.s32 %s23, %s340
          %s342 = smul.addr %s341, 8
          %s343 = scalar_lea.hbm %s5, %s342
          %s345 = sshll.u32 %s334, 4
          %s346 = int_to_ptr.vmem [resolvable:$true] %s345
          %s347 = sshll.u32 %s343, 4
          %s348 = int_to_ptr.hbm [resolvable:$true] %s347
          %350 = dma.vmem_to_hbm [thread:$0]  %s346, 128, %s348, %s331
        $region44: #{tpu_custom_call.1} parent=39 // pred_fallthru
          _
      $region40: #{tpu_custom_call.1} parent=5 // pred_fallthru
        _
      %p351 = scmp.le.s32.totalorder 2, %s14
      // Predicated region
      $region45: #{tpu_custom_call.1} parent=5 // pred_check
        %p352 = pneg %p351
      $region46: #{tpu_custom_call.1} parent=5 // pred_check_branch
        %354 = sbr.rel (%p352) target = $region48
      $region47: #{tpu_custom_call.1} parent=5 // pred_region
        %s355 = ssub.s32 %s14, 2
        // Predicated region
        $region49: #{tpu_custom_call.1} parent=47 // pred_check
          %p356 = pneg %p174
        $region50: #{tpu_custom_call.1} parent=47 // pred_check_branch
          %358 = sbr.rel (%p356) target = $region52
        $region51: #{tpu_custom_call.1} parent=47 // pred_region
          %s359 = sand.u32 %s159, 1
          %s360 = scalar_lea.sflag [#allocation3], %s359
          %s361 = sand.u32 %s159, 1
          %s362 = smul.addr %s361, 8
          %s363 = scalar_lea.vmem [#allocation2], %s362
          %365 = dma.done %s360, 128
        $region52: #{tpu_custom_call.1} parent=47 // pred_fallthru
          _
      $region48: #{tpu_custom_call.1} parent=5 // pred_fallthru
        _
    $region6: #{tpu_custom_call.1} parent=1 // loop_footer
      %s18 = sadd.s32 1, %s14
    $region7: #{tpu_custom_call.1} parent=1 // loop_footer_branch
      %13 = sbr.rel target = $region3
    $region8: #{tpu_custom_call.1} parent=1 // loop_exit
      _
    %366 = vsyncpa [#allocation3], 1
    %s367 = scalar_lea.sflag [#allocation3], 1
    %368 = vsyncpa %s367, 1

</llo_original>
